<compile_context>
chip_gen: v6e
topology: v6e:2x2x1
jax: 0.10.0
libtpu: 0.0.40
codegen_flags: <defaults>
</compile_context>

<pallas_src>
import jax
import jax.numpy as jnp
from jax.experimental import pallas as pl
from jax.experimental.pallas import tpu as pltpu


def _round_up(n, m):
    return ((n + m - 1) // m) * m


def _tpu_generation_and_vmem():
    """Best-effort TPU generation tag + physical VMEM bytes. Never raises."""
    kind = ""
    try:
        kind = jax.devices()[0].device_kind.lower()
    except Exception:
        pass
    gen = "unknown"
    for tag in ("v7", "v6", "v5", "v4"):
        if tag in kind:
            gen = tag
            break
    vmem = None
    try:
        vmem = int(pltpu.get_tpu_info().vmem_capacity_bytes)
    except Exception:
        vmem = None
    if vmem is None or vmem <= 0:
        vmem = (64 if gen == "v7" else 128) * 1024 * 1024
    return gen, vmem


def _default_tiles(gen):
    """(tm, tf) defaults per generation."""
    if gen == "v6":
        return 1024, 512   # v6e needs ~tm>=700 FLOPs/weight-byte to be MXU-bound
    if gen == "v7":
        return 512, 256    # 64 MiB VMEM/TC: shrink the weight-slab footprint, keep tm=512
    return 512, 512        # v5e / unknown: already compute-bound at tm=512


def _pick_dff_tile(d_ff_pad, desired):
    """Largest multiple of 128 that divides d_ff_pad and is <= desired."""
    tf = max(128, (min(desired, d_ff_pad) // 128) * 128)
    while d_ff_pad % tf != 0:
        tf -= 128
    return tf


# ----------------------------------------------------------------------------- kernels

def _swiglu_kernel_acc(x_ref, wuv_ref, buv_ref, wo_ref, bo_ref, o_ref, acc_ref):
    """Variant with a dedicated f32 VMEM accumulator (non-f32 output dtypes)."""
    k = pl.program_id(1)

    @pl.when(k == 0)
    def _init():
        acc_ref[...] = jnp.zeros_like(acc_ref)

    tf = wo_ref.shape[0]
    # Fused up/gate projection for this d_ff slab: one MXU matmul, f32 accumulation.
    uv = jnp.dot(x_ref[...], wuv_ref[...], preferred_element_type=jnp.float32)
    uv = uv + buv_ref[...]                       # biases kept in f32
    u = uv[:, :tf]
    v = uv[:, tf:]
    h = u * (v * jax.nn.sigmoid(v))              # SwiGLU gate: u * silu(v)  (VPU + EUP)
    acc_ref[...] += jnp.dot(h.astype(wo_ref.dtype), wo_ref[...],
                            preferred_element_type=jnp.float32)

    @pl.when(k == pl.num_programs(1) - 1)
    def _finalize():
        o_ref[...] = (acc_ref[...] + bo_ref[...]).astype(o_ref.dtype)


def _swiglu_kernel_f32out(x_ref, wuv_ref, buv_ref, wo_ref, bo_ref, o_ref):
    """f32 output: accumulate directly into the resident output block (no scratch)."""
    k = pl.program_id(1)

    @pl.when(k == 0)
    def _init():
        o_ref[...] = jnp.zeros_like(o_ref)

    tf = wo_ref.shape[0]
    uv = jnp.dot(x_ref[...], wuv_ref[...], preferred_element_type=jnp.float32)
    uv = uv + buv_ref[...]
    u = uv[:, :tf]
    v = uv[:, tf:]
    h = u * (v * jax.nn.sigmoid(v))
    o_ref[...] += jnp.dot(h.astype(wo_ref.dtype), wo_ref[...],
                          preferred_element_type=jnp.float32)

    @pl.when(k == pl.num_programs(1) - 1)
    def _finalize():
        o_ref[...] = o_ref[...] + bo_ref[...]


# ----------------------------------------------------------------------------- wrapper

def prepare_swiglu_params(w_in_gate, b_in_gate, w_out, b_out, *, d_ff_tile=None,
                          compute_dtype=jnp.bfloat16, generation=None):
    """One-time weight packing (call at init, NOT per forward step).

    w_in_gate: (2*d_ff, d_model)  PyTorch nn.Linear(d_model, 2*d_ff) layout.
    w_out:     (d_model, d_ff)    PyTorch nn.Linear(d_ff, d_model) layout.

    Packs weights slab-major:
      wuv: (K, d_model, 2*tf)  -- slab k is [Wu_k | Wv_k], fully contiguous in HBM
      wo:  (K, tf, d_model)
    d_ff is zero-padded to a multiple of 128 so tf is always lane-aligned.
    """
    two_dff, d_model = w_in_gate.shape
    d_ff = two_dff // 2

    gen = generation
    if gen is None:
        gen, _ = _tpu_generation_and_vmem()
    _, tf_desired = _default_tiles(gen)

    d_ff_pad = _round_up(d_ff, 128)
    tf = _pick_dff_tile(d_ff_pad, tf_desired) if d_ff_tile is None else d_ff_tile
    assert tf % 128 == 0 and d_ff_pad % tf == 0
    K = d_ff_pad // tf
    pad = d_ff_pad - d_ff

    w_in_t = w_in_gate.T.astype(jnp.float32)            # (d_model, 2*d_ff)
    wu = w_in_t[:, :d_ff]
    wv = w_in_t[:, d_ff:]
    if pad:
        wu = jnp.pad(wu, ((0, 0), (0, pad)))             # zero cols -> u == 0 -> h == 0
        wv = jnp.pad(wv, ((0, 0), (0, pad)))
    wu = wu.reshape(d_model, K, tf)
    wv = wv.reshape(d_model, K, tf)
    wuv = jnp.transpose(jnp.concatenate([wu, wv], axis=2), (1, 0, 2))   # (K, d_model, 2*tf)

    bu = b_in_gate[:d_ff].astype(jnp.float32)
    bv = b_in_gate[d_ff:].astype(jnp.float32)
    if pad:
        bu = jnp.pad(bu, (0, pad))
        bv = jnp.pad(bv, (0, pad))
    buv = jnp.concatenate([bu.reshape(K, 1, tf), bv.reshape(K, 1, tf)], axis=2)  # (K,1,2*tf)

    wo = w_out.T.astype(jnp.float32)                     # (d_ff, d_model)
    if pad:
        wo = jnp.pad(wo, ((0, pad), (0, 0)))
    wo = wo.reshape(K, tf, d_model)                      # slab-major
    bo = b_out.reshape(1, d_model).astype(jnp.float32)

    return dict(
        wuv=wuv.astype(compute_dtype),
        buv=buv,                                         # f32
        wo=wo.astype(compute_dtype),
        bo=bo,                                           # f32
        d_ff=d_ff,
        d_ff_pad=d_ff_pad,
        d_ff_tile=tf,
        generation=gen,
    )


def swiglu_feed_forward(x, params, *, tm=None):
    """x: [B, S, d_model]; params from prepare_swiglu_params. Returns [B, S, d_model]."""
    wuv, buv, wo, bo = params["wuv"], params["buv"], params["wo"], params["bo"]
    tf = params["d_ff_tile"]
    d_ff_pad = params["d_ff_pad"]
    K, d_model, two_tf = wuv.shape
    compute_dtype = wuv.dtype

    gen, vmem_phys = _tpu_generation_and_vmem()
    tm_default, _ = _default_tiles(gen)
    if tm is None:
        tm = tm_default

    B, S, _ = x.shape
    M = B * S
    out_dtype = x.dtype
    x2d = x.reshape(M, d_model).astype(compute_dtype)

    # Large row tiles to fill the MXU; pad rows so the grid divides exactly.
    m8 = _round_up(M, 8)
    tm = max(8, min(tm, m8))
    m_pad = _round_up(m8, tm)
    if m_pad != M:
        x2d = jnp.pad(x2d, ((0, m_pad - M), (0, 0)))
    n_row_tiles = m_pad // tm
    # Note (v7x): n_row_tiles >= 2 is needed for the "parallel" M axis to occupy both
    # TensorCores; decode-like tiny-M workloads would want an output d_model split instead.
    grid = (n_row_tiles, K)

    use_inplace_acc = jnp.dtype(out_dtype) == jnp.float32
    kernel = _swiglu_kernel_f32out if use_inplace_acc else _swiglu_kernel_acc
    scratch_shapes = [] if use_inplace_acc else [pltpu.VMEM((tm, d_model), jnp.float32)]

    cb = jnp.dtype(compute_dtype).itemsize
    ob = jnp.dtype(out_dtype).itemsize
    # Live-VMEM estimate: double-buffered streamed tiles + accumulator + in-kernel temporaries.
    vmem_est = (2 * tm * d_model * cb                   # x tile
                + 2 * d_model * two_tf * cb             # fused [Wu|Wv] slab
                + 2 * two_tf * 4                        # fused bias slab (f32)
                + 2 * tf * d_model * cb                 # Wo slab
                + 2 * d_model * 4                       # bo
                + 2 * tm * d_model * ob                 # output tile
                + (0 if use_inplace_acc else tm * d_model * 4)   # f32 acc scratch
                + tm * two_tf * 4                       # f32 uv temporary
                + tm * tf * (4 + cb))                   # h (f32) + its cast copy
    # Generation-aware cap: ~13/16 of physical VMEM (~104 MiB on v5e/v6e, ~52 MiB on v7x).
    vmem_cap = (vmem_phys * 13) // 16
    vmem_limit = int(min(max(int(1.5 * vmem_est), 32 * 1024 * 1024), vmem_cap))

    flops = 2 * m_pad * d_model * 2 * d_ff_pad + 2 * m_pad * d_ff_pad * d_model
    # Honest HBM traffic: weights are re-streamed once per row tile; x and out move once.
    bytes_accessed = (x2d.size * cb + m_pad * d_model * ob
                      + n_row_tiles * (wuv.size * cb + wo.size * cb
                                       + buv.size * 4 + bo.size * 4))

    out2d = pl.pallas_call(
        kernel,
        out_shape=jax.ShapeDtypeStruct((m_pad, d_model), out_dtype),
        grid_spec=pltpu.PrefetchScalarGridSpec(
            num_scalar_prefetch=0,
            grid=grid,
            in_specs=[
                # x rows: reused (resident) across the streamed d_ff axis.
                pl.BlockSpec((tm, d_model), lambda i, k: (i, 0)),
                # Slab-major fused [Wu|Wv]: one contiguous DMA per step.
                pl.BlockSpec((None, d_model, two_tf), lambda i, k: (k, 0, 0)),
                pl.BlockSpec((None, 1, two_tf), lambda i, k: (k, 0, 0)),
                # Slab-major Wo.
                pl.BlockSpec((None, tf, d_model), lambda i, k: (k, 0, 0)),
                # bo (constant, tiny).
                pl.BlockSpec((1, d_model), lambda i, k: (0, 0)),
            ],
            out_specs=pl.BlockSpec((tm, d_model), lambda i, k: (i, 0)),
            scratch_shapes=scratch_shapes,
        ),
        compiler_params=pltpu.CompilerParams(
            dimension_semantics=("parallel", "arbitrary"),
            vmem_limit_bytes=vmem_limit,
        ),
        cost_estimate=pl.CostEstimate(
            flops=int(flops),
            transcendentals=int(m_pad * d_ff_pad),
            bytes_accessed=int(bytes_accessed),
        ),
    )(x2d, wuv, buv, wo, bo)

    if m_pad != M:
        out2d = out2d[:M]
    return out2d.reshape(B, S, d_model)


# ----------------------------------------------------------------------------- reference

def swiglu_ref(x, w_in_gate, b_in_gate, w_out, b_out):
    h = jnp.einsum("bsd,fd->bsf", x, w_in_gate) + b_in_gate
    d_ff = w_in_gate.shape[0] // 2
    u, v = h[..., :d_ff], h[..., d_ff:]
    g = u * (v * jax.nn.sigmoid(v))
    return jnp.einsum("bsf,df->bsd", g, w_out) + b_out


if __name__ == "__main__":
    # Small shapes consistent with the module: batch=2, seq=8, d_model=32, d_ff=64.
    B, S, d_model, d_ff = 2, 8, 32, 64
    key = jax.random.PRNGKey(0)
    kx, k1, k2, k3, k4 = jax.random.split(key, 5)

    x = jax.random.normal(kx, (B, S, d_model), dtype=jnp.float32)
    w_in_gate = jax.random.normal(k1, (2 * d_ff, d_model), jnp.float32) * (1.0 / d_model ** 0.5)
    b_in_gate = jax.random.normal(k2, (2 * d_ff,), jnp.float32) * 0.01
    w_out = jax.random.normal(k3, (d_model, d_ff), jnp.float32) * (1.0 / d_ff ** 0.5)
    b_out = jax.random.normal(k4, (d_model,), jnp.float32) * 0.01

    y_ref = swiglu_ref(x, w_in_gate, b_in_gate, w_out, b_out)

    # f32 weights, f32 output (in-place accumulation path): tight correctness check.
    params_f32 = prepare_swiglu_params(w_in_gate, b_in_gate, w_out, b_out,
                                       compute_dtype=jnp.float32)
    y32 = jax.block_until_ready(swiglu_feed_forward(x, params_f32))
    assert y32.shape == (B, S, d_model)
    assert jnp.allclose(y32, y_ref, atol=1e-3, rtol=1e-3), "f32 kernel mismatch vs reference"

    # bf16 weights (production default), f32 output: loose check (bf16 quantization error).
    params_bf16 = prepare_swiglu_params(w_in_gate, b_in_gate, w_out, b_out,
                                        compute_dtype=jnp.bfloat16)
    y16 = jax.block_until_ready(swiglu_feed_forward(x, params_bf16))
    assert y16.shape == (B, S, d_model)
    assert jnp.allclose(y16, y_ref, atol=1e-1, rtol=1e-1), "bf16 kernel mismatch vs reference"

    # bf16 activations + bf16 output: exercises the scratch-accumulator kernel variant.
    y16b = jax.block_until_ready(swiglu_feed_forward(x.astype(jnp.bfloat16), params_bf16))
    assert y16b.shape == (B, S, d_model)
    assert jnp.allclose(y16b.astype(jnp.float32), y_ref, atol=2e-1, rtol=2e-1), \
        "bf16-out kernel mismatch vs reference"

    print("KERNEL_OK")
</pallas_src>

<mosaic_0001>
module attributes {stable_mosaic.version = 11 : i64} {
  func.func @_swiglu_kernel_f32out(%arg0: i32, %arg1: i32, %arg2: memref<16x32xf32, #tpu.memory_space<vmem>>, %arg3: memref<1x32x256xf32, #tpu.memory_space<vmem>>, %arg4: memref<1x1x256xf32, #tpu.memory_space<vmem>>, %arg5: memref<1x128x32xf32, #tpu.memory_space<vmem>>, %arg6: memref<1x32xf32, #tpu.memory_space<vmem>>, %arg7: memref<16x32xf32, #tpu.memory_space<vmem>>) attributes {dimension_semantics = [#tpu.dimension_semantics<parallel>, #tpu.dimension_semantics<arbitrary>], iteration_bounds = array<i64: 1, 1>, scalar_prefetch = 0 : i64, scratch_operands = 0 : i64, tpu.core_type = #tpu.core_type<tc>, window_params = [{transform_indices = @transform_0, window_bounds = array<i64: 16, 32>}, {transform_indices = @transform_1, window_bounds = array<i64: 1, 32, 256>}, {transform_indices = @transform_2, window_bounds = array<i64: 1, 1, 256>}, {transform_indices = @transform_3, window_bounds = array<i64: 1, 128, 32>}, {pipeline_mode = #tpu.pipeline_mode<synchronous>, transform_indices = @transform_4, window_bounds = array<i64: 1, 32>}, {transform_indices = @transform_5, window_bounds = array<i64: 16, 32>}]} {
    %c0_i32 = arith.constant 0 : i32
    %0 = arith.cmpi eq, %arg1, %c0_i32 : i32
    %1 = arith.extui %0 : i1 to i32
    %c0_i32_0 = arith.constant 0 : i32
    %2 = arith.cmpi ne, %1, %c0_i32_0 : i32
    scf.if %2 {
      %cst_19 = arith.constant 0.000000e+00 : f32
      %29 = vector.broadcast %cst_19 : f32 to vector<16x32xf32>
      %c0_20 = arith.constant 0 : index
      %c0_21 = arith.constant 0 : index
      %30 = vector.load %arg7[%c0_20, %c0_21] : memref<16x32xf32, #tpu.memory_space<vmem>>, vector<16x32xf32>
      tpu.vector_store %arg7[%c0_20, %c0_21], %29 {strides = array<i32>} : memref<16x32xf32, #tpu.memory_space<vmem>>, vector<16x32xf32>,
    } else {
    }
    %c0 = arith.constant 0 : index
    %c0_1 = arith.constant 0 : index
    %3 = vector.load %arg2[%c0, %c0_1] : memref<16x32xf32, #tpu.memory_space<vmem>>, vector<16x32xf32>
    %c0_2 = arith.constant 0 : index
    %c0_3 = arith.constant 0 : index
    %c0_4 = arith.constant 0 : index
    %4 = vector.load %arg3[%c0_2, %c0_3, %c0_4] : memref<1x32x256xf32, #tpu.memory_space<vmem>>, vector<1x32x256xf32>
    %5 = vector.shape_cast %4 : vector<1x32x256xf32> to vector<32x256xf32>
    %cst = arith.constant dense<0.000000e+00> : vector<16x256xf32>
    %6 = tpu.matmul %3, %5, %cst {dimension_numbers = #tpu.dot_dimension_numbers<[1], [0], [0], [1], [0, 0, 1, 1], [], []>} : vector<16x32xf32>, vector<32x256xf32>, vector<16x256xf32> -> vector<16x256xf32>
    %c0_5 = arith.constant 0 : index
    %c0_6 = arith.constant 0 : index
    %c0_7 = arith.constant 0 : index
    %7 = vector.load %arg4[%c0_5, %c0_6, %c0_7] : memref<1x1x256xf32, #tpu.memory_space<vmem>>, vector<1x1x256xf32>
    %8 = vector.shape_cast %7 : vector<1x1x256xf32> to vector<1x256xf32>
    %9 = vector.broadcast %8 : vector<1x256xf32> to vector<16x256xf32>
    %10 = arith.addf %6, %9 : vector<16x256xf32>
    %11 = vector.extract_strided_slice %10 {offsets = [0, 0], sizes = [16, 128], strides = [1, 1]} : vector<16x256xf32> to vector<16x128xf32>
    %12 = vector.extract_strided_slice %10 {offsets = [0, 128], sizes = [16, 128], strides = [1, 1]} : vector<16x256xf32> to vector<16x128xf32>
    %13 = arith.negf %12 : vector<16x128xf32>
    %14 = math.exp %13 : vector<16x128xf32>
    %cst_8 = arith.constant 1.000000e+00 : f32
    %15 = vector.broadcast %cst_8 : f32 to vector<16x128xf32>
    %16 = arith.addf %15, %14 : vector<16x128xf32>
    %17 = arith.divf %15, %16 : vector<16x128xf32>
    %18 = arith.mulf %12, %17 : vector<16x128xf32>
    %19 = arith.mulf %11, %18 : vector<16x128xf32>
    %c0_9 = arith.constant 0 : index
    %c0_10 = arith.constant 0 : index
    %20 = vector.load %arg7[%c0_9, %c0_10] : memref<16x32xf32, #tpu.memory_space<vmem>>, vector<16x32xf32>
    %c0_11 = arith.constant 0 : index
    %c0_12 = arith.constant 0 : index
    %c0_13 = arith.constant 0 : index
    %21 = vector.load %arg5[%c0_11, %c0_12, %c0_13] : memref<1x128x32xf32, #tpu.memory_space<vmem>>, vector<1x128x32xf32>
    %22 = vector.shape_cast %21 : vector<1x128x32xf32> to vector<128x32xf32>
    %cst_14 = arith.constant dense<0.000000e+00> : vector<16x32xf32>
    %23 = tpu.matmul %19, %22, %cst_14 {dimension_numbers = #tpu.dot_dimension_numbers<[1], [0], [0], [1], [0, 0, 1, 1], [], []>} : vector<16x128xf32>, vector<128x32xf32>, vector<16x32xf32> -> vector<16x32xf32>
    %24 = arith.addf %20, %23 : vector<16x32xf32>
    %c0_15 = arith.constant 0 : index
    %c0_16 = arith.constant 0 : index
    %25 = vector.load %arg7[%c0_15, %c0_16] : memref<16x32xf32, #tpu.memory_space<vmem>>, vector<16x32xf32>
    tpu.vector_store %arg7[%c0_15, %c0_16], %24 {strides = array<i32>} : memref<16x32xf32, #tpu.memory_space<vmem>>, vector<16x32xf32>,
    %c0_i32_17 = arith.constant 0 : i32
    %26 = arith.cmpi eq, %arg1, %c0_i32_17 : i32
    %27 = arith.extui %26 : i1 to i32
    %c0_i32_18 = arith.constant 0 : i32
    %28 = arith.cmpi ne, %27, %c0_i32_18 : i32
    scf.if %28 {
      %c0_19 = arith.constant 0 : index
      %c0_20 = arith.constant 0 : index
      %29 = vector.load %arg7[%c0_19, %c0_20] : memref<16x32xf32, #tpu.memory_space<vmem>>, vector<16x32xf32>
      %c0_21 = arith.constant 0 : index
      %c0_22 = arith.constant 0 : index
      %30 = vector.load %arg6[%c0_21, %c0_22] : memref<1x32xf32, #tpu.memory_space<vmem>>, vector<1x32xf32>
      %31 = vector.broadcast %30 : vector<1x32xf32> to vector<16x32xf32>
      %32 = arith.addf %29, %31 : vector<16x32xf32>
      %c0_23 = arith.constant 0 : index
      %c0_24 = arith.constant 0 : index
      %33 = vector.load %arg7[%c0_23, %c0_24] : memref<16x32xf32, #tpu.memory_space<vmem>>, vector<16x32xf32>
      tpu.vector_store %arg7[%c0_23, %c0_24], %32 {strides = array<i32>} : memref<16x32xf32, #tpu.memory_space<vmem>>, vector<16x32xf32>,
    } else {
    }
    return
  }
  func.func @transform_0(%arg0: i32, %arg1: i32) -> (i32, i32) {
    %c0_i32 = arith.constant 0 : i32
    %c0_i32_0 = arith.constant 0 : i32
    return %arg0, %c0_i32 : i32, i32
  }
  func.func @transform_1(%arg0: i32, %arg1: i32) -> (i32, i32, i32) {
    %c0_i32 = arith.constant 0 : i32
    %c0_i32_0 = arith.constant 0 : i32
    %c0_i32_1 = arith.constant 0 : i32
    return %arg1, %c0_i32, %c0_i32_0 : i32, i32, i32
  }
  func.func @transform_2(%arg0: i32, %arg1: i32) -> (i32, i32, i32) {
    %c0_i32 = arith.constant 0 : i32
    %c0_i32_0 = arith.constant 0 : i32
    %c0_i32_1 = arith.constant 0 : i32
    return %arg1, %c0_i32, %c0_i32_0 : i32, i32, i32
  }
  func.func @transform_3(%arg0: i32, %arg1: i32) -> (i32, i32, i32) {
    %c0_i32 = arith.constant 0 : i32
    %c0_i32_0 = arith.constant 0 : i32
    %c0_i32_1 = arith.constant 0 : i32
    return %arg1, %c0_i32, %c0_i32_0 : i32, i32, i32
  }
  func.func @transform_4(%arg0: i32, %arg1: i32) -> (i32, i32) {
    %c0_i32 = arith.constant 0 : i32
    %c0_i32_0 = arith.constant 0 : i32
    %c0_i32_1 = arith.constant 0 : i32
    return %c0_i32, %c0_i32_0 : i32, i32
  }
  func.func @transform_5(%arg0: i32, %arg1: i32) -> (i32, i32) {
    %c0_i32 = arith.constant 0 : i32
    %c0_i32_0 = arith.constant 0 : i32
    return %arg0, %c0_i32 : i32, i32
  }
}

</mosaic_0001>

<llo_original>
// kernel: tpu_custom_call.1
$region0: #{tpu_custom_call.1}
  #allocation0 [shape = 'u32[]', space=smem, size = 0x4, offset = 0x4, fixed_abs, tag = 'smem constant byte address 0x4 - core index']
  #allocation1 [shape = 'u32[144,128]{1,0:T(1,128)}', space=vmem, size = 0x12000, scoped, tag = 'internal scratch']
  %s0 = inlined_call_operand.vmem [shape: f32[16,32], index: 0, kind: input, shape index: {}]
  %s1 = inlined_call_operand.vmem [shape: f32[1,32,256], index: 1, kind: input, shape index: {}]
  %s2 = inlined_call_operand.vmem [shape: f32[1,1,256], index: 2, kind: input, shape index: {}]
  %s3 = inlined_call_operand.vmem [shape: f32[1,128,32], index: 3, kind: input, shape index: {}]
  %s4 = inlined_call_operand.vmem [shape: f32[1,32], index: 4, kind: input, shape index: {}]
  %s5 = inlined_call_operand.hbm [shape: f32[16,32], index: 5, kind: output, shape index: {}]
  %s6 = sld [smem:[#allocation0]]
  $region38: #{tpu_custom_call.1} parent=0
    _
  %s8 = ssub.s32 1, %s6
  %s9 = scalar_select 0, %s8, %s6
  $region1: #{tpu_custom_call.1} parent=0
    #allocation2 [shape = 'u8[8192]{0}', space=vmem, size = 0x2000, scoped, tag = 'output window, operand 0, single buffered']
    #allocation3 [shape = 's32[1]{0}', space=sflag, size = 0x4, scoped, tag = 'scoped memory for tpu_custom_call.1']
    %10 = vsyncpa [#allocation3], 0
    // Predicated region
    $region2: #{tpu_custom_call.1} parent=1 // pred_check
      _
    $region3: #{tpu_custom_call.1} parent=1 // pred_check_branch
      %12 = sbr.rel (0) target = $region5
    $region4: #{tpu_custom_call.1} parent=1 // pred_region
      _
    $region5: #{tpu_custom_call.1} parent=1 // pred_fallthru
      _
    // Predicated region
    $region6: #{tpu_custom_call.1} parent=1 // pred_check
      _
    $region7: #{tpu_custom_call.1} parent=1 // pred_check_branch
      %14 = sbr.rel (0) target = $region9
    $region8: #{tpu_custom_call.1} parent=1 // pred_region
      _
    $region9: #{tpu_custom_call.1} parent=1 // pred_fallthru
      _
    // Predicated region
    $region10: #{tpu_custom_call.1} parent=1 // pred_check
      _
    $region11: #{tpu_custom_call.1} parent=1 // pred_check_branch
      %16 = sbr.rel (0) target = $region13
    $region12: #{tpu_custom_call.1} parent=1 // pred_region
      _
    $region13: #{tpu_custom_call.1} parent=1 // pred_fallthru
      _
    // Predicated region
    $region14: #{tpu_custom_call.1} parent=1 // pred_check
      _
    $region15: #{tpu_custom_call.1} parent=1 // pred_check_branch
      %18 = sbr.rel (0) target = $region17
    $region16: #{tpu_custom_call.1} parent=1 // pred_region
      _
    $region17: #{tpu_custom_call.1} parent=1 // pred_fallthru
      _
    // Predicated region
    $region18: #{tpu_custom_call.1} parent=1 // pred_check
      _
    $region19: #{tpu_custom_call.1} parent=1 // pred_check_branch
      %20 = sbr.rel (0) target = $region21
    $region20: #{tpu_custom_call.1} parent=1 // pred_region
      _
    $region21: #{tpu_custom_call.1} parent=1 // pred_fallthru
      _
    %p21 = scmp.eq.s32.totalorder 0, 0
    // Predicated region
    $region22: #{tpu_custom_call.1} parent=1 // pred_check
      %p22 = pneg %p21
    $region23: #{tpu_custom_call.1} parent=1 // pred_check_branch
      %24 = sbr.rel (%p22) target = $region25
    $region24: #{tpu_custom_call.1} parent=1 // pred_region
      %vm25 = vcmask 261120
      %26 = vst.msk [vmem:[#allocation2] sm:$0xff] %vm25, 0.0
      %27 = vst.msk [vmem:[#allocation2 + $0x8] sm:$0xff] %vm25, 0.0
    $region25: #{tpu_custom_call.1} parent=1 // pred_fallthru
      _
    %v28 = vld [vmem:[%s0] sm:$0xff]
    %v29 = vld [vmem:[%s0 + $0x8] sm:$0xff]
    %v30 = vld [vmem:[%s1] sm:$0xff]
    %v31 = vld [vmem:[%s1 + $0x8] sm:$0xff]
    %v32 = vld [vmem:[%s1 + $0x10] sm:$0xff]
    %v33 = vld [vmem:[%s1 + $0x18] sm:$0xff]
    %v34 = vld [vmem:[%s1 + $0x20] sm:$0xff]
    %v35 = vld [vmem:[%s1 + $0x28] sm:$0xff]
    %v36 = vld [vmem:[%s1 + $0x30] sm:$0xff]
    %v37 = vld [vmem:[%s1 + $0x38] sm:$0xff]
    %v38 = vld [vmem:[%s2] sm:$0x3]
    %v40 = vlaneseq
    %v41 = vshrl.u32 %v40, 7
    %v42 = vsub.s32 0, %v41
    %v43 = vrot.slane %v38, %v42
    %v44 = vlaneseq
    %v45 = vshrl.u32 %v44, 7
    %v46 = vsub.s32 1, %v45
    %v47 = vrot.slane %v38, %v46
    %vm50 = vcmask 261120
    %v52 = vsel %vm50, %v28, 0
    %v55 = vsel %vm50, %v29, 0
    %57 = vmatprep.subr.mxu0 0.0
    %58 = vmatpush1.msra.mxu0 0.0
    %59 = vmatprep.subr.mxu0 0.0
    %60 = vmatpush1.msra.mxu0 0.0
    %61 = vmatprep.subr.mxu0 0.0
    %62 = vmatpush1.msra.mxu0 0.0
    %63 = vmatprep.subr.mxu0 0.0
    %64 = vmatpush1.msra.mxu0 0.0
    %65 = vmatprep.subr.mxu0 0.0
    %66 = vmatpush1.msra.mxu0 0.0
    %67 = vmatprep.subr.mxu0 0.0
    %68 = vmatpush1.msra.mxu0 0.0
    %69 = vmatprep.subr.mxu0 0.0
    %70 = vmatpush1.msra.mxu0 0.0
    %71 = vmatprep.subr.mxu0 0.0
    %72 = vmatpush1.msra.mxu0 0.0
    %73 = vmatprep.subr.mxu0 0.0
    %74 = vmatpush1.msra.mxu0 0.0
    %75 = vmatprep.subr.mxu0 0.0
    %76 = vmatpush1.msra.mxu0 0.0
    %77 = vmatprep.subr.mxu0 0.0
    %78 = vmatpush1.msra.mxu0 0.0
    %79 = vmatprep.subr.mxu0 0.0
    %80 = vmatpush1.msra.mxu0 0.0
    %81 = vmatprep.subr.mxu0 %v37
    %82 = vmatpush1.msra.mxu0 %v36
    %83 = vmatprep.subr.mxu0 %v35
    %84 = vmatpush1.msra.mxu0 %v34
    %85 = vmatprep.subr.mxu0 %v33
    %86 = vmatpush1.msra.mxu0 %v32
    %87 = vmatprep.subr.mxu0 %v31
    %88 = vmatpush1.msra.mxu0 %v30
    %89 = vmatprep.subr.mxu0 0.0
    %90 = vmatpush2.msra.mxu0 0.0
    %91 = vmatprep.subr.mxu0 0.0
    %92 = vmatpush2.msra.mxu0 0.0
    %93 = vmatprep.subr.mxu0 0.0
    %94 = vmatpush2.msra.mxu0 0.0
    %95 = vmatprep.subr.mxu0 0.0
    %96 = vmatpush2.msra.mxu0 0.0
    %97 = vmatprep.subr.mxu0 0.0
    %98 = vmatpush2.msra.mxu0 0.0
    %99 = vmatprep.subr.mxu0 0.0
    %100 = vmatpush2.msra.mxu0 0.0
    %101 = vmatprep.subr.mxu0 0.0
    %102 = vmatpush2.msra.mxu0 0.0
    %103 = vmatprep.subr.mxu0 0.0
    %104 = vmatpush2.msra.mxu0 0.0
    %105 = vmatprep.subr.mxu0 0.0
    %106 = vmatpush2.msra.mxu0 0.0
    %107 = vmatprep.subr.mxu0 0.0
    %108 = vmatpush2.msra.mxu0 0.0
    %109 = vmatprep.subr.mxu0 0.0
    %110 = vmatpush2.msra.mxu0 0.0
    %111 = vmatprep.subr.mxu0 0.0
    %112 = vmatpush2.msra.mxu0 0.0
    %113 = vmatprep.subr.mxu0 0.0
    %114 = vmatpush2.msra.mxu0 0.0
    %115 = vmatprep.subr.mxu0 0.0
    %116 = vmatpush2.msra.mxu0 0.0
    %117 = vmatprep.subr.mxu0 0.0
    %118 = vmatpush2.msra.mxu0 0.0
    %119 = vmatprep.subr.mxu0 0.0
    %120 = vmatpush2.msra.mxu0 0.0
    %121 = vmatprep.mubr.f32.mxu0 0.0
    %122 = vmatmul.mubr.f32.gmra.mxu0 %v52
    %v123 = vpop.f32.mrf.mxu0
    %v124 = vadd.f32 %v43, %v123
    %v125 = vpop.f32.mrf.mxu0
    %v126 = vadd.f32 %v47, %v125
    %127 = vmatprep.mubr.f32.mxu0 0.0
    %128 = vmatmul.mubr.f32.gmra.mxu0 %v55
    %v129 = vpop.f32.mrf.mxu0
    %v130 = vadd.f32 %v43, %v129
    %v131 = vpop.f32.mrf.mxu0
    %v132 = vadd.f32 %v47, %v131
    %133 = vdwg.mxu0
    %v134 = vxor.u32 %v126, 2147483648
    %v135 = vxor.u32 %v132, 2147483648
    %v136 = vmul.f32 %v134, 1.442695
    %v137 = vpow.pop %v136
    %v138 = vmul.f32 %v135, 1.442695
    %v139 = vpow.pop %v138
    %v140 = vadd.f32 %v137, 1.0
    %v141 = vadd.f32 %v139, 1.0
    %v142 = vrcp.pop %v140
    %v143 = vmul.f32 1.0, %v142
    %v144 = vrcp.pop %v141
    %v145 = vmul.f32 1.0, %v144
    %v146 = vmul.f32 %v126, %v143
    %v147 = vmul.f32 %v132, %v145
    %v148 = vmul.f32 %v124, %v146
    %v149 = vmul.f32 %v130, %v147
    %v150 = vld [vmem:[#allocation2] sm:$0xff]
    %v151 = vld [vmem:[#allocation2 + $0x8] sm:$0xff]
    %v152 = vld [vmem:[%s3] sm:$0xff]
    %v153 = vld [vmem:[%s3 + $0x8] sm:$0xff]
    %v154 = vld [vmem:[%s3 + $0x10] sm:$0xff]
    %v155 = vld [vmem:[%s3 + $0x18] sm:$0xff]
    %v156 = vld [vmem:[%s3 + $0x20] sm:$0xff]
    %v157 = vld [vmem:[%s3 + $0x28] sm:$0xff]
    %v158 = vld [vmem:[%s3 + $0x30] sm:$0xff]
    %v159 = vld [vmem:[%s3 + $0x38] sm:$0xff]
    %v160 = vld [vmem:[%s3 + $0x40] sm:$0xff]
    %v161 = vld [vmem:[%s3 + $0x48] sm:$0xff]
    %v162 = vld [vmem:[%s3 + $0x50] sm:$0xff]
    %v163 = vld [vmem:[%s3 + $0x58] sm:$0xff]
    %v164 = vld [vmem:[%s3 + $0x60] sm:$0xff]
    %v165 = vld [vmem:[%s3 + $0x68] sm:$0xff]
    %v166 = vld [vmem:[%s3 + $0x70] sm:$0xff]
    %v167 = vld [vmem:[%s3 + $0x78] sm:$0xff]
    %168 = vmatprep.subr.mxu0 0.0
    %169 = vmatpush1.msra.mxu0 %v167
    %170 = vmatprep.subr.mxu0 0.0
    %171 = vmatpush1.msra.mxu0 %v166
    %172 = vmatprep.subr.mxu0 0.0
    %173 = vmatpush1.msra.mxu0 %v165
    %174 = vmatprep.subr.mxu0 0.0
    %175 = vmatpush1.msra.mxu0 %v164
    %176 = vmatprep.subr.mxu0 0.0
    %177 = vmatpush1.msra.mxu0 %v163
    %178 = vmatprep.subr.mxu0 0.0
    %179 = vmatpush1.msra.mxu0 %v162
    %180 = vmatprep.subr.mxu0 0.0
    %181 = vmatpush1.msra.mxu0 %v161
    %182 = vmatprep.subr.mxu0 0.0
    %183 = vmatpush1.msra.mxu0 %v160
    %184 = vmatprep.subr.mxu0 0.0
    %185 = vmatpush1.msra.mxu0 %v159
    %186 = vmatprep.subr.mxu0 0.0
    %187 = vmatpush1.msra.mxu0 %v158
    %188 = vmatprep.subr.mxu0 0.0
    %189 = vmatpush1.msra.mxu0 %v157
    %190 = vmatprep.subr.mxu0 0.0
    %191 = vmatpush1.msra.mxu0 %v156
    %192 = vmatprep.subr.mxu0 0.0
    %193 = vmatpush1.msra.mxu0 %v155
    %194 = vmatprep.subr.mxu0 0.0
    %195 = vmatpush1.msra.mxu0 %v154
    %196 = vmatprep.subr.mxu0 0.0
    %197 = vmatpush1.msra.mxu0 %v153
    %198 = vmatprep.subr.mxu0 0.0
    %199 = vmatpush1.msra.mxu0 %v152
    %200 = vmatprep.subr.mxu0 0.0
    %201 = vmatpush2.msra.mxu0 0.0
    %202 = vmatprep.subr.mxu0 0.0
    %203 = vmatpush2.msra.mxu0 0.0
    %204 = vmatprep.subr.mxu0 0.0
    %205 = vmatpush2.msra.mxu0 0.0
    %206 = vmatprep.subr.mxu0 0.0
    %207 = vmatpush2.msra.mxu0 0.0
    %208 = vmatprep.subr.mxu0 0.0
    %209 = vmatpush2.msra.mxu0 0.0
    %210 = vmatprep.subr.mxu0 0.0
    %211 = vmatpush2.msra.mxu0 0.0
    %212 = vmatprep.subr.mxu0 0.0
    %213 = vmatpush2.msra.mxu0 0.0
    %214 = vmatprep.subr.mxu0 0.0
    %215 = vmatpush2.msra.mxu0 0.0
    %216 = vmatprep.subr.mxu0 0.0
    %217 = vmatpush2.msra.mxu0 0.0
    %218 = vmatprep.subr.mxu0 0.0
    %219 = vmatpush2.msra.mxu0 0.0
    %220 = vmatprep.subr.mxu0 0.0
    %221 = vmatpush2.msra.mxu0 0.0
    %222 = vmatprep.subr.mxu0 0.0
    %223 = vmatpush2.msra.mxu0 0.0
    %224 = vmatprep.subr.mxu0 0.0
    %225 = vmatpush2.msra.mxu0 0.0
    %226 = vmatprep.subr.mxu0 0.0
    %227 = vmatpush2.msra.mxu0 0.0
    %228 = vmatprep.subr.mxu0 0.0
    %229 = vmatpush2.msra.mxu0 0.0
    %230 = vmatprep.subr.mxu0 0.0
    %231 = vmatpush2.msra.mxu0 0.0
    %232 = vmatprep.mubr.f32.mxu0 0.0
    %233 = vmatmul.mubr.f32.gmra.mxu0 %v148
    %v234 = vpop.f32.mrf.mxu0
    %v235 = vadd.f32 0.0, %v234
    %v236 = vpop.f32.mrf.mxu0
    %237 = vmatprep.mubr.f32.mxu0 0.0
    %238 = vmatmul.mubr.f32.gmra.mxu0 %v149
    %v239 = vpop.f32.mrf.mxu0
    %v240 = vadd.f32 0.0, %v239
    %v241 = vpop.f32.mrf.mxu0
    %242 = vdwg.mxu0
    %v243 = vadd.f32 %v150, %v235
    %v244 = vadd.f32 %v151, %v240
    %245 = vst.msk [vmem:[#allocation2] sm:$0xff] %vm50, %v243
    %246 = vst.msk [vmem:[#allocation2 + $0x8] sm:$0xff] %vm50, %v244
    // Predicated region
    $region26: #{tpu_custom_call.1} parent=1 // pred_check
      %p247 = pneg %p21
    $region27: #{tpu_custom_call.1} parent=1 // pred_check_branch
      %249 = sbr.rel (%p247) target = $region29
    $region28: #{tpu_custom_call.1} parent=1 // pred_region
      %v250 = vld [vmem:[#allocation2] sm:$0xff]
      %v251 = vld [vmem:[#allocation2 + $0x8] sm:$0xff]
      %v252 = vld [vmem:[%s4] sm:$0x1]
      %v254 = vlaneseq
      %v255 = vshrl.u32 %v254, 7
      %v256 = vsub.s32 0, %v255
      %v257 = vrot.slane %v252, %v256
      %v259 = vadd.f32 %v250, %v257
      %v260 = vadd.f32 %v251, %v257
      %261 = vst.msk [vmem:[#allocation2] sm:$0xff] %vm50, %v259
      %262 = vst.msk [vmem:[#allocation2 + $0x8] sm:$0xff] %vm50, %v260
    $region29: #{tpu_custom_call.1} parent=1 // pred_fallthru
      _
    // Predicated region
    $region30: #{tpu_custom_call.1} parent=1 // pred_check
      _
    $region31: #{tpu_custom_call.1} parent=1 // pred_check_branch
      %264 = sbr.rel (0) target = $region33
    $region32: #{tpu_custom_call.1} parent=1 // pred_region
      %s266 = ssub.s32 256, 256
      %267 = vsyncadd [#allocation3], %s266
      %s268 = sshll.u32 [#allocation2], 4
      %s269 = int_to_ptr.vmem [resolvable:$true] %s268
      %274 = dma.vmem_to_hbm [thread:$0]  %s269, 256, %s5, [#allocation3], 128, 128, 8
    $region33: #{tpu_custom_call.1} parent=1 // pred_fallthru
      _
    // Predicated region
    $region34: #{tpu_custom_call.1} parent=1 // pred_check
      _
    $region35: #{tpu_custom_call.1} parent=1 // pred_check_branch
      %276 = sbr.rel (0) target = $region37
    $region36: #{tpu_custom_call.1} parent=1 // pred_region
      %277 = dma.done [#allocation3], 256
    $region37: #{tpu_custom_call.1} parent=1 // pred_fallthru
      _
    %278 = vsyncpa [#allocation3], 1

</llo_original>
